<compile_context>
chip_gen: v5e
topology: v5e:2x2
jax: 0.10.0
libtpu: 0.0.40
codegen_flags: <defaults>
</compile_context>

<pallas_src>
import functools

import jax
import jax.numpy as jnp
from jax.experimental import pallas as pl
from jax.experimental.pallas import tpu as pltpu


def _round_up(n, m):
    return ((n + m - 1) // m) * m


def _pad2(a, rows, cols):
    """Zero-pad a 2-D array to (rows, cols)."""
    out = jnp.zeros((rows, cols), a.dtype)
    return out.at[: a.shape[0], : a.shape[1]].set(a)


# --------------------------------------------------------------------------
# Kernel
# --------------------------------------------------------------------------
def _net_kernel(x_ref,
                w1_ref, b1_ref,
                w2_ref, b2_ref,
                w3_ref, b3_ref,
                wo_ref, bo_ref,
                *rest,
                use_dropout):
    if use_dropout:
        m1_ref, m2_ref, m3_ref, o_ref = rest
    else:
        (o_ref,) = rest

    x = x_ref[...]                                           # (B_pad, D_pad)

    # fc1 + tanh + dropout
    h = jnp.tanh(jnp.dot(x, w1_ref[...], preferred_element_type=jnp.float32)
                 + b1_ref[...])
    if use_dropout:
        h = h * m1_ref[0]

    # fc2 + tanh + dropout
    h = jnp.tanh(jnp.dot(h, w2_ref[...], preferred_element_type=jnp.float32)
                 + b2_ref[...])
    if use_dropout:
        h = h * m2_ref[0]

    # fc3 + tanh + dropout
    h = jnp.tanh(jnp.dot(h, w3_ref[...], preferred_element_type=jnp.float32)
                 + b3_ref[...])
    if use_dropout:
        h = h * m3_ref[0]

    # Output head (hidden -> 1): VPU multiply + lane reduction, written as a
    # lane-dense row (batch along lanes) instead of an N=1 MXU matmul.
    head = jnp.sum(h * wo_ref[...], axis=-1) + bo_ref[0, 0]  # (B_pad,)
    o_ref[...] = head.reshape(o_ref.shape).astype(o_ref.dtype)


# --------------------------------------------------------------------------
# Wrapper
# --------------------------------------------------------------------------
def net_forward(x, pparams, *, dropout_p, key=None, n_samples=1, training=True):
    """Run T MC-dropout forward passes of the MLP in one gridded pallas_call.

    x:        (B, n_inputs) float32
    pparams:  padded params from pad_params() (weights stored (in, out))
    returns:  (T, B, 1) float32  (one stochastic forward pass per sample)
    """
    B, D = x.shape
    Dp = pparams["w1"].shape[0]
    H0 = pparams["w1"].shape[1]
    H1 = pparams["w2"].shape[1]
    H2 = pparams["w3"].shape[1]
    Bp = _round_up(B, 128)            # batch lives on lanes of the output row
    T = int(n_samples)

    x_pad = jnp.zeros((Bp, Dp), jnp.float32).at[:B, :D].set(x.astype(jnp.float32))

    use_dropout = bool(training) and float(dropout_p) > 0.0

    const2 = lambda t: (0, 0)         # weights/biases: VMEM-resident, never re-fetched
    inputs = [x_pad,
              pparams["w1"], pparams["b1"],
              pparams["w2"], pparams["b2"],
              pparams["w3"], pparams["b3"],
              pparams["wo"], pparams["bo"]]
    in_specs = [pl.BlockSpec((Bp, Dp), const2),
                pl.BlockSpec((Dp, H0), const2), pl.BlockSpec((1, H0), const2),
                pl.BlockSpec((H0, H1), const2), pl.BlockSpec((1, H1), const2),
                pl.BlockSpec((H1, H2), const2), pl.BlockSpec((1, H2), const2),
                pl.BlockSpec((1, H2), const2), pl.BlockSpec((1, 1), const2)]

    if use_dropout:
        if key is None:
            raise ValueError("training=True with dropout_p > 0 requires a PRNG key")
        keep = 1.0 - float(dropout_p)
        k1, k2, k3 = jax.random.split(key, 3)

        def make_mask(k, width):
            bern = jax.random.bernoulli(k, keep, (T, Bp, width))
            return jnp.where(bern, jnp.float32(1.0 / keep), jnp.float32(0.0))

        inputs += [make_mask(k1, H0), make_mask(k2, H1), make_mask(k3, H2)]
        in_specs += [pl.BlockSpec((1, Bp, H0), lambda t: (t, 0, 0)),
                     pl.BlockSpec((1, Bp, H1), lambda t: (t, 0, 0)),
                     pl.BlockSpec((1, Bp, H2), lambda t: (t, 0, 0))]

    out = pl.pallas_call(
        functools.partial(_net_kernel, use_dropout=use_dropout),
        grid=(T,),
        in_specs=in_specs,
        out_specs=pl.BlockSpec((1, 1, Bp), lambda t: (t, 0, 0)),
        out_shape=jax.ShapeDtypeStruct((T, 1, Bp), jnp.float32),
        compiler_params=pltpu.CompilerParams(
            dimension_semantics=("parallel",)),
    )(*inputs)

    return out[:, 0, :B][..., None]   # (T, B, 1)


# --------------------------------------------------------------------------
# Parameter construction (mimics nn.Linear init), plus lane-aligned padding
# --------------------------------------------------------------------------
def init_params(key, n_inputs, n_units=(50, 50, 50)):
    """U(-1/sqrt(fan_in), 1/sqrt(fan_in)) init; weights stored (in, out)."""
    dims = [n_inputs, n_units[0], n_units[1], n_units[2], 1]
    names = ["1", "2", "3", "o"]
    params = {}
    for i, name in enumerate(names):
        fan_in, fan_out = dims[i], dims[i + 1]
        key, kw, kb = jax.random.split(key, 3)
        bound = 1.0 / (fan_in ** 0.5)
        params["w" + name] = jax.random.uniform(
            kw, (fan_in, fan_out), jnp.float32, -bound, bound)
        params["b" + name] = jax.random.uniform(
            kb, (1, fan_out), jnp.float32, -bound, bound)
    return params


def pad_params(params):
    """Zero-pad every feature dim up to a multiple of 128 (lane width).

    Padding is exact: padded weight rows/cols and biases are zero, so padded
    lanes carry tanh(0)=0 through the network and never touch real outputs.
    """
    D, H0 = params["w1"].shape
    H1 = params["w2"].shape[1]
    H2 = params["w3"].shape[1]
    Dp, H0p, H1p, H2p = (_round_up(v, 128) for v in (D, H0, H1, H2))
    return {
        "w1": _pad2(params["w1"], Dp, H0p),  "b1": _pad2(params["b1"], 1, H0p),
        "w2": _pad2(params["w2"], H0p, H1p), "b2": _pad2(params["b2"], 1, H1p),
        "w3": _pad2(params["w3"], H1p, H2p), "b3": _pad2(params["b3"], 1, H2p),
        "wo": _pad2(params["wo"].T, 1, H2p),           # head weight as a lane row
        "bo": params["bo"].reshape(1, 1),
    }


# --------------------------------------------------------------------------
if __name__ == "__main__":
    key = jax.random.PRNGKey(0)
    k_param, k_x, k_drop = jax.random.split(key, 3)

    batch = 8
    n_inputs = 32
    n_units = (50, 50, 50)
    dropout_p = 0.05

    params = init_params(k_param, n_inputs, n_units)
    pparams = pad_params(params)
    x = jax.random.normal(k_x, (batch, n_inputs), jnp.float32)

    # MC-dropout: 16 stochastic forward passes fused into one gridded kernel.
    T = 16
    mc = net_forward(x, pparams, dropout_p=dropout_p, key=k_drop,
                     n_samples=T, training=True)
    mc = jax.block_until_ready(mc)
    assert mc.shape == (T, batch, 1)
    assert bool(jnp.all(jnp.isfinite(mc)))

    # Eval mode (dropout off), cross-checked against a pure-JAX reference.
    ev = net_forward(x, pparams, dropout_p=dropout_p, key=None,
                     n_samples=1, training=False)
    ev = jax.block_until_ready(ev)[0]              # (batch, 1)

    def ref_eval(x, p):
        h = jnp.tanh(x @ p["w1"] + p["b1"])
        h = jnp.tanh(h @ p["w2"] + p["b2"])
        h = jnp.tanh(h @ p["w3"] + p["b3"])
        return h @ p["wo"] + p["bo"]

    ref = ref_eval(x, params)
    assert ev.shape == (batch, 1)
    assert bool(jnp.allclose(ev, ref, atol=1e-5, rtol=1e-5))

    print("KERNEL_OK")
</pallas_src>

<mosaic_0001>
module attributes {stable_mosaic.version = 11 : i64} {
  func.func @_net_kernel(%arg0: i32, %arg1: memref<128x128xf32, #tpu.memory_space<vmem>>, %arg2: memref<128x128xf32, #tpu.memory_space<vmem>>, %arg3: memref<1x128xf32, #tpu.memory_space<vmem>>, %arg4: memref<128x128xf32, #tpu.memory_space<vmem>>, %arg5: memref<1x128xf32, #tpu.memory_space<vmem>>, %arg6: memref<128x128xf32, #tpu.memory_space<vmem>>, %arg7: memref<1x128xf32, #tpu.memory_space<vmem>>, %arg8: memref<1x128xf32, #tpu.memory_space<vmem>>, %arg9: memref<1x1xf32, #tpu.memory_space<vmem>>, %arg10: memref<1x128x128xf32, #tpu.memory_space<vmem>>, %arg11: memref<1x128x128xf32, #tpu.memory_space<vmem>>, %arg12: memref<1x128x128xf32, #tpu.memory_space<vmem>>, %arg13: memref<1x1x128xf32, #tpu.memory_space<vmem>>) attributes {dimension_semantics = [#tpu.dimension_semantics<parallel>], iteration_bounds = array<i64: 16>, scalar_prefetch = 0 : i64, scratch_operands = 0 : i64, tpu.core_type = #tpu.core_type<tc>, window_params = [{pipeline_mode = #tpu.pipeline_mode<synchronous>, transform_indices = @transform_0, window_bounds = array<i64: 128, 128>}, {pipeline_mode = #tpu.pipeline_mode<synchronous>, transform_indices = @transform_1, window_bounds = array<i64: 128, 128>}, {pipeline_mode = #tpu.pipeline_mode<synchronous>, transform_indices = @transform_2, window_bounds = array<i64: 1, 128>}, {pipeline_mode = #tpu.pipeline_mode<synchronous>, transform_indices = @transform_3, window_bounds = array<i64: 128, 128>}, {pipeline_mode = #tpu.pipeline_mode<synchronous>, transform_indices = @transform_4, window_bounds = array<i64: 1, 128>}, {pipeline_mode = #tpu.pipeline_mode<synchronous>, transform_indices = @transform_5, window_bounds = array<i64: 128, 128>}, {pipeline_mode = #tpu.pipeline_mode<synchronous>, transform_indices = @transform_6, window_bounds = array<i64: 1, 128>}, {pipeline_mode = #tpu.pipeline_mode<synchronous>, transform_indices = @transform_7, window_bounds = array<i64: 1, 128>}, {pipeline_mode = #tpu.pipeline_mode<synchronous>, transform_indices = @transform_8, window_bounds = array<i64: 1, 1>}, {transform_indices = @transform_9, window_bounds = array<i64: 1, 128, 128>}, {transform_indices = @transform_10, window_bounds = array<i64: 1, 128, 128>}, {transform_indices = @transform_11, window_bounds = array<i64: 1, 128, 128>}, {transform_indices = @transform_12, window_bounds = array<i64: 1, 1, 128>}]} {
    %c0 = arith.constant 0 : index
    %c0_0 = arith.constant 0 : index
    %0 = vector.load %arg1[%c0, %c0_0] : memref<128x128xf32, #tpu.memory_space<vmem>>, vector<128x128xf32>
    %c0_1 = arith.constant 0 : index
    %c0_2 = arith.constant 0 : index
    %1 = vector.load %arg2[%c0_1, %c0_2] : memref<128x128xf32, #tpu.memory_space<vmem>>, vector<128x128xf32>
    %cst = arith.constant dense<0.000000e+00> : vector<128x128xf32>
    %2 = tpu.matmul %0, %1, %cst {dimension_numbers = #tpu.dot_dimension_numbers<[1], [0], [0], [1], [0, 0, 1, 1], [], []>} : vector<128x128xf32>, vector<128x128xf32>, vector<128x128xf32> -> vector<128x128xf32>
    %c0_3 = arith.constant 0 : index
    %c0_4 = arith.constant 0 : index
    %3 = vector.load %arg3[%c0_3, %c0_4] : memref<1x128xf32, #tpu.memory_space<vmem>>, vector<1x128xf32>
    %4 = vector.broadcast %3 : vector<1x128xf32> to vector<128x128xf32>
    %5 = arith.addf %2, %4 : vector<128x128xf32>
    %6 = math.tanh %5 : vector<128x128xf32>
    %c0_5 = arith.constant 0 : index
    %c0_6 = arith.constant 0 : index
    %c0_7 = arith.constant 0 : index
    %7 = vector.load %arg10[%c0_5, %c0_6, %c0_7] : memref<1x128x128xf32, #tpu.memory_space<vmem>>, vector<1x128x128xf32>
    %8 = vector.shape_cast %7 : vector<1x128x128xf32> to vector<128x128xf32>
    %9 = arith.mulf %6, %8 : vector<128x128xf32>
    %c0_8 = arith.constant 0 : index
    %c0_9 = arith.constant 0 : index
    %10 = vector.load %arg4[%c0_8, %c0_9] : memref<128x128xf32, #tpu.memory_space<vmem>>, vector<128x128xf32>
    %cst_10 = arith.constant dense<0.000000e+00> : vector<128x128xf32>
    %11 = tpu.matmul %9, %10, %cst_10 {dimension_numbers = #tpu.dot_dimension_numbers<[1], [0], [0], [1], [0, 0, 1, 1], [], []>} : vector<128x128xf32>, vector<128x128xf32>, vector<128x128xf32> -> vector<128x128xf32>
    %c0_11 = arith.constant 0 : index
    %c0_12 = arith.constant 0 : index
    %12 = vector.load %arg5[%c0_11, %c0_12] : memref<1x128xf32, #tpu.memory_space<vmem>>, vector<1x128xf32>
    %13 = vector.broadcast %12 : vector<1x128xf32> to vector<128x128xf32>
    %14 = arith.addf %11, %13 : vector<128x128xf32>
    %15 = math.tanh %14 : vector<128x128xf32>
    %c0_13 = arith.constant 0 : index
    %c0_14 = arith.constant 0 : index
    %c0_15 = arith.constant 0 : index
    %16 = vector.load %arg11[%c0_13, %c0_14, %c0_15] : memref<1x128x128xf32, #tpu.memory_space<vmem>>, vector<1x128x128xf32>
    %17 = vector.shape_cast %16 : vector<1x128x128xf32> to vector<128x128xf32>
    %18 = arith.mulf %15, %17 : vector<128x128xf32>
    %c0_16 = arith.constant 0 : index
    %c0_17 = arith.constant 0 : index
    %19 = vector.load %arg6[%c0_16, %c0_17] : memref<128x128xf32, #tpu.memory_space<vmem>>, vector<128x128xf32>
    %cst_18 = arith.constant dense<0.000000e+00> : vector<128x128xf32>
    %20 = tpu.matmul %18, %19, %cst_18 {dimension_numbers = #tpu.dot_dimension_numbers<[1], [0], [0], [1], [0, 0, 1, 1], [], []>} : vector<128x128xf32>, vector<128x128xf32>, vector<128x128xf32> -> vector<128x128xf32>
    %c0_19 = arith.constant 0 : index
    %c0_20 = arith.constant 0 : index
    %21 = vector.load %arg7[%c0_19, %c0_20] : memref<1x128xf32, #tpu.memory_space<vmem>>, vector<1x128xf32>
    %22 = vector.broadcast %21 : vector<1x128xf32> to vector<128x128xf32>
    %23 = arith.addf %20, %22 : vector<128x128xf32>
    %24 = math.tanh %23 : vector<128x128xf32>
    %c0_21 = arith.constant 0 : index
    %c0_22 = arith.constant 0 : index
    %c0_23 = arith.constant 0 : index
    %25 = vector.load %arg12[%c0_21, %c0_22, %c0_23] : memref<1x128x128xf32, #tpu.memory_space<vmem>>, vector<1x128x128xf32>
    %26 = vector.shape_cast %25 : vector<1x128x128xf32> to vector<128x128xf32>
    %27 = arith.mulf %24, %26 : vector<128x128xf32>
    %c0_24 = arith.constant 0 : index
    %c0_25 = arith.constant 0 : index
    %28 = vector.load %arg8[%c0_24, %c0_25] : memref<1x128xf32, #tpu.memory_space<vmem>>, vector<1x128xf32>
    %29 = vector.broadcast %28 : vector<1x128xf32> to vector<128x128xf32>
    %30 = arith.mulf %27, %29 : vector<128x128xf32>
    %cst_26 = arith.constant dense<0.000000e+00> : vector<128xf32>
    %31 = vector.multi_reduction <add>, %30, %cst_26 [1] : vector<128x128xf32> to vector<128xf32>
    %c0_27 = arith.constant 0 : index
    %c0_28 = arith.constant 0 : index
    %32 = vector.load %arg9[%c0_27, %c0_28] : memref<1x1xf32, #tpu.memory_space<vmem>>, vector<1x1xf32>
    %33 = vector.extract %32[0, 0] : f32 from vector<1x1xf32>
    %34 = vector.broadcast %33 : f32 to vector<128xf32>
    %35 = arith.addf %31, %34 : vector<128xf32>
    %36 = vector.shape_cast %35 : vector<128xf32> to vector<1x1x128xf32>
    %c0_29 = arith.constant 0 : index
    %c0_30 = arith.constant 0 : index
    %c0_31 = arith.constant 0 : index
    %37 = vector.load %arg13[%c0_29, %c0_30, %c0_31] : memref<1x1x128xf32, #tpu.memory_space<vmem>>, vector<1x1x128xf32>
    tpu.vector_store %arg13[%c0_29, %c0_30, %c0_31], %36 {strides = array<i32>} : memref<1x1x128xf32, #tpu.memory_space<vmem>>, vector<1x1x128xf32>,
    return
  }
  func.func @transform_0(%arg0: i32) -> (i32, i32) {
    %c0_i32 = arith.constant 0 : i32
    %c0_i32_0 = arith.constant 0 : i32
    %c0_i32_1 = arith.constant 0 : i32
    return %c0_i32, %c0_i32_0 : i32, i32
  }
  func.func @transform_1(%arg0: i32) -> (i32, i32) {
    %c0_i32 = arith.constant 0 : i32
    %c0_i32_0 = arith.constant 0 : i32
    %c0_i32_1 = arith.constant 0 : i32
    return %c0_i32, %c0_i32_0 : i32, i32
  }
  func.func @transform_2(%arg0: i32) -> (i32, i32) {
    %c0_i32 = arith.constant 0 : i32
    %c0_i32_0 = arith.constant 0 : i32
    %c0_i32_1 = arith.constant 0 : i32
    return %c0_i32, %c0_i32_0 : i32, i32
  }
  func.func @transform_3(%arg0: i32) -> (i32, i32) {
    %c0_i32 = arith.constant 0 : i32
    %c0_i32_0 = arith.constant 0 : i32
    %c0_i32_1 = arith.constant 0 : i32
    return %c0_i32, %c0_i32_0 : i32, i32
  }
  func.func @transform_4(%arg0: i32) -> (i32, i32) {
    %c0_i32 = arith.constant 0 : i32
    %c0_i32_0 = arith.constant 0 : i32
    %c0_i32_1 = arith.constant 0 : i32
    return %c0_i32, %c0_i32_0 : i32, i32
  }
  func.func @transform_5(%arg0: i32) -> (i32, i32) {
    %c0_i32 = arith.constant 0 : i32
    %c0_i32_0 = arith.constant 0 : i32
    %c0_i32_1 = arith.constant 0 : i32
    return %c0_i32, %c0_i32_0 : i32, i32
  }
  func.func @transform_6(%arg0: i32) -> (i32, i32) {
    %c0_i32 = arith.constant 0 : i32
    %c0_i32_0 = arith.constant 0 : i32
    %c0_i32_1 = arith.constant 0 : i32
    return %c0_i32, %c0_i32_0 : i32, i32
  }
  func.func @transform_7(%arg0: i32) -> (i32, i32) {
    %c0_i32 = arith.constant 0 : i32
    %c0_i32_0 = arith.constant 0 : i32
    %c0_i32_1 = arith.constant 0 : i32
    return %c0_i32, %c0_i32_0 : i32, i32
  }
  func.func @transform_8(%arg0: i32) -> (i32, i32) {
    %c0_i32 = arith.constant 0 : i32
    %c0_i32_0 = arith.constant 0 : i32
    %c0_i32_1 = arith.constant 0 : i32
    return %c0_i32, %c0_i32_0 : i32, i32
  }
  func.func @transform_9(%arg0: i32) -> (i32, i32, i32) {
    %c0_i32 = arith.constant 0 : i32
    %c0_i32_0 = arith.constant 0 : i32
    %c0_i32_1 = arith.constant 0 : i32
    return %arg0, %c0_i32, %c0_i32_0 : i32, i32, i32
  }
  func.func @transform_10(%arg0: i32) -> (i32, i32, i32) {
    %c0_i32 = arith.constant 0 : i32
    %c0_i32_0 = arith.constant 0 : i32
    %c0_i32_1 = arith.constant 0 : i32
    return %arg0, %c0_i32, %c0_i32_0 : i32, i32, i32
  }
  func.func @transform_11(%arg0: i32) -> (i32, i32, i32) {
    %c0_i32 = arith.constant 0 : i32
    %c0_i32_0 = arith.constant 0 : i32
    %c0_i32_1 = arith.constant 0 : i32
    return %arg0, %c0_i32, %c0_i32_0 : i32, i32, i32
  }
  func.func @transform_12(%arg0: i32) -> (i32, i32, i32) {
    %c0_i32 = arith.constant 0 : i32
    %c0_i32_0 = arith.constant 0 : i32
    %c0_i32_1 = arith.constant 0 : i32
    return %arg0, %c0_i32, %c0_i32_0 : i32, i32, i32
  }
}

</mosaic_0001>

<llo_original>
// kernel: tpu_custom_call.1
$region0: #{tpu_custom_call.1}
  #allocation0 [shape = 'u32[]', space=smem, size = 0x4, offset = 0x4, fixed_abs, tag = 'smem constant byte address 0x4 - core index']
  #allocation1 [shape = 'u32[72,128]{1,0:T(1,128)}', space=vmem, size = 0x9000, scoped, tag = 'internal scratch']
  #allocation2 [shape = 'f32[1,1]{1,0:T(1,128)S(1)}', space=vmem, size = 0x200, scoped, tag = 'scoped memory for tpu_custom_call.1']
  %s0 = inlined_call_operand.hbm [shape: f32[128,128], index: 0, kind: input, shape index: {}]
  %s1 = inlined_call_operand.hbm [shape: f32[128,128], index: 1, kind: input, shape index: {}]
  %s2 = inlined_call_operand.vmem [shape: f32[1,128], index: 2, kind: input, shape index: {}]
  %s3 = inlined_call_operand.hbm [shape: f32[128,128], index: 3, kind: input, shape index: {}]
  %s4 = inlined_call_operand.vmem [shape: f32[1,128], index: 4, kind: input, shape index: {}]
  %s5 = inlined_call_operand.hbm [shape: f32[128,128], index: 5, kind: input, shape index: {}]
  %s6 = inlined_call_operand.vmem [shape: f32[1,128], index: 6, kind: input, shape index: {}]
  %s7 = inlined_call_operand.vmem [shape: f32[1,128], index: 7, kind: input, shape index: {}]
  %s8 = inlined_call_operand.<no memory space> [shape: f32[1,1], index: 8, kind: input, shape index: {}]
  %s9 = inlined_call_operand.hbm [shape: f32[16,128,128], index: 9, kind: input, shape index: {}]
  %s10 = inlined_call_operand.hbm [shape: f32[16,128,128], index: 10, kind: input, shape index: {}]
  %s11 = inlined_call_operand.hbm [shape: f32[16,128,128], index: 11, kind: input, shape index: {}]
  %s12 = inlined_call_operand.hbm [shape: f32[16,1,128], index: 12, kind: output, shape index: {}]
  %s13 = sld [smem:[#allocation0]]
  $region109: #{tpu_custom_call.1} parent=0
    _
  %s15 = ssub.s32 1, %s13
  %s16 = scalar_select 0, %s15, %s13
  %v17 = vstv %s8
  %18 = vst [vmem:[#allocation2] sm:$0x1] %v17
  $region1: #{tpu_custom_call.1} parent=0
    #allocation3 [shape = 'u8[65536]{0}', space=vmem, size = 0x10000, scoped, tag = 'input window, operand 0, single buffered']
    #allocation4 [shape = 's32[2]{0}', space=sflag, size = 0x8, scoped, tag = 'scoped memory for tpu_custom_call.1']
    #allocation5 [shape = 's32[2]{0}', space=sflag, size = 0x8, scoped, tag = 'scoped memory for tpu_custom_call.1']
    #allocation6 [shape = 'u8[65536]{0}', space=vmem, size = 0x10000, scoped, tag = 'input window, operand 1, single buffered']
    #allocation7 [shape = 's32[1]{0}', space=sflag, size = 0x4, scoped, tag = 'scoped memory for tpu_custom_call.1']
    #allocation8 [shape = 'u8[65536]{0}', space=vmem, size = 0x10000, scoped, tag = 'input window, operand 3, single buffered']
    #allocation9 [shape = 'u8[65536]{0}', space=vmem, size = 0x10000, scoped, tag = 'input window, operand 5, single buffered']
    #allocation10 [shape = 's32[1]{0}', space=sflag, size = 0x4, scoped, tag = 'scoped memory for tpu_custom_call.1']
    #allocation11 [shape = 'u8[131072]{0}', space=vmem, size = 0x20000, scoped, tag = 'input window, operand 9']
    #allocation12 [shape = 'u8[131072]{0}', space=vmem, size = 0x20000, scoped, tag = 'input window, operand 10']
    #allocation13 [shape = 'u8[131072]{0}', space=vmem, size = 0x20000, scoped, tag = 'input window, operand 11']
    #allocation14 [shape = 'u8[1024]{0}', space=vmem, size = 0x400, scoped, tag = 'output window, operand 0']
    %19 = vsyncpa [#allocation4], 0
    %20 = vsyncpa [#allocation7], 0
    %21 = vsyncpa [#allocation10], 0
    %22 = vsyncpa [#allocation5], 0
    %s23 = scalar_lea.sflag [#allocation5], 1
    %24 = vsyncpa %s23, 0
    loop: start=0, step=1, limit=18
    $region2: #{tpu_custom_call.1} parent=1 // loop_pre_header
      _
    $region3: #{tpu_custom_call.1} parent=1 // loop_header
      %s26 = sphi 0, %s30
      %p27 = scmp.ge.s32.totalorder %s26, 18
      %s34 = sphi 0, %s34
      %s36 = sphi 0, %s34
      %s37 = sphi 0, %s36
      %s51 = sphi 0, %s37
      %s55 = sphi 0, %s55
      %s57 = sphi 0, %s55
      %s58 = sphi 0, %s57
      %s72 = sphi 0, %s58
      %s76 = sphi 0, %s76
      %s78 = sphi 0, %s76
      %s79 = sphi 0, %s78
      %s93 = sphi 0, %s79
      %s97 = sphi 0, %s97
      %s99 = sphi 0, %s97
      %s100 = sphi 0, %s99
      %s114 = sphi 0, %s100
      %s118 = sphi 0, %s118
      %s120 = sphi 0, %s118
      %s121 = sphi 0, %s120
      %s135 = sphi 0, %s121
      %s139 = sphi 0, %s139
      %s141 = sphi 0, %s139
      %s142 = sphi 0, %s141
      %s156 = sphi 0, %s142
      %s160 = sphi 0, %s160
      %s162 = sphi 0, %s160
      %s163 = sphi 0, %s162
      %s177 = sphi 0, %s163
      %s181 = sphi 0, %s181
      %s183 = sphi 0, %s181
      %s184 = sphi 0, %s183
      %s198 = sphi 0, %s184
      %s202 = sphi 0, %s202
      %s204 = sphi 0, %s202
      %s205 = sphi 0, %s204
      %s219 = sphi 0, %s205
      %s225 = sphi 0, %s227
      %s228 = sphi 0, %s225
      %s229 = sphi 0, %s228
      %s245 = sphi 0, %s229
      %s251 = sphi 0, %s253
      %s254 = sphi 0, %s251
      %s255 = sphi 0, %s254
      %s271 = sphi 0, %s255
      %s277 = sphi 0, %s279
      %s280 = sphi 0, %s277
      %s281 = sphi 0, %s280
      %s297 = sphi 0, %s281
      %s303 = sphi 0, %s305
      %s306 = sphi 0, %s303
      %s307 = sphi 0, %s306
      %s323 = sphi 0, %s307
    $region4: #{tpu_custom_call.1} parent=1 // loop_header_branch
      %29 = sbr.rel (%p27) target = $region8
    $region5: #{tpu_custom_call.1} parent=1 // loop_body
      %s31 = ssub.s32 %s26, 1
      %s32 = ssub.s32 %s26, 2
      %s33 = sadd.s32 %s26, 1
      %s35 = sadd.s32 %s34, 1
      %p38 = scmp.eq.s32.totalorder %s26, 15
      %p39 = scmp.ne.s32.totalorder %s34, %s36
      %p40 = scmp.eq.s32.totalorder %s26, 0
      %p41 = por %p39, %p40
      %p42 = scmp.ne.s32.totalorder %s34, %s36
      %p43 = scmp.eq.s32.totalorder %s31, 15
      %p44 = por %p42, %p43
      %p45 = scmp.ne.s32.totalorder %s36, %s37
      %p46 = scmp.eq.s32.totalorder %s31, 0
      %p47 = por %p45, %p46
      %p48 = scmp.ne.s32.totalorder %s36, %s37
      %p49 = scmp.eq.s32.totalorder %s32, 15
      %p50 = por %p48, %p49
      %p52 = scmp.ne.s32.totalorder %s37, %s51
      %p53 = scmp.eq.s32.totalorder %s32, 0
      %p54 = por %p52, %p53
      %s56 = sadd.s32 %s55, 1
      %p59 = scmp.eq.s32.totalorder %s26, 15
      %p60 = scmp.ne.s32.totalorder %s55, %s57
      %p61 = scmp.eq.s32.totalorder %s26, 0
      %p62 = por %p60, %p61
      %p63 = scmp.ne.s32.totalorder %s55, %s57
      %p64 = scmp.eq.s32.totalorder %s31, 15
      %p65 = por %p63, %p64
      %p66 = scmp.ne.s32.totalorder %s57, %s58
      %p67 = scmp.eq.s32.totalorder %s31, 0
      %p68 = por %p66, %p67
      %p69 = scmp.ne.s32.totalorder %s57, %s58
      %p70 = scmp.eq.s32.totalorder %s32, 15
      %p71 = por %p69, %p70
      %p73 = scmp.ne.s32.totalorder %s58, %s72
      %p74 = scmp.eq.s32.totalorder %s32, 0
      %p75 = por %p73, %p74
      %s77 = sadd.s32 %s76, 1
      %p80 = scmp.eq.s32.totalorder %s26, 15
      %p81 = scmp.ne.s32.totalorder %s76, %s78
      %p82 = scmp.eq.s32.totalorder %s26, 0
      %p83 = por %p81, %p82
      %p84 = scmp.ne.s32.totalorder %s76, %s78
      %p85 = scmp.eq.s32.totalorder %s31, 15
      %p86 = por %p84, %p85
      %p87 = scmp.ne.s32.totalorder %s78, %s79
      %p88 = scmp.eq.s32.totalorder %s31, 0
      %p89 = por %p87, %p88
      %p90 = scmp.ne.s32.totalorder %s78, %s79
      %p91 = scmp.eq.s32.totalorder %s32, 15
      %p92 = por %p90, %p91
      %p94 = scmp.ne.s32.totalorder %s79, %s93
      %p95 = scmp.eq.s32.totalorder %s32, 0
      %p96 = por %p94, %p95
      %s98 = sadd.s32 %s97, 1
      %p101 = scmp.eq.s32.totalorder %s26, 15
      %p102 = scmp.ne.s32.totalorder %s97, %s99
      %p103 = scmp.eq.s32.totalorder %s26, 0
      %p104 = por %p102, %p103
      %p105 = scmp.ne.s32.totalorder %s97, %s99
      %p106 = scmp.eq.s32.totalorder %s31, 15
      %p107 = por %p105, %p106
      %p108 = scmp.ne.s32.totalorder %s99, %s100
      %p109 = scmp.eq.s32.totalorder %s31, 0
      %p110 = por %p108, %p109
      %p111 = scmp.ne.s32.totalorder %s99, %s100
      %p112 = scmp.eq.s32.totalorder %s32, 15
      %p113 = por %p111, %p112
      %p115 = scmp.ne.s32.totalorder %s100, %s114
      %p116 = scmp.eq.s32.totalorder %s32, 0
      %p117 = por %p115, %p116
      %s119 = sadd.s32 %s118, 1
      %p122 = scmp.eq.s32.totalorder %s26, 15
      %p123 = scmp.ne.s32.totalorder %s118, %s120
      %p124 = scmp.eq.s32.totalorder %s26, 0
      %p125 = por %p123, %p124
      %p126 = scmp.ne.s32.totalorder %s118, %s120
      %p127 = scmp.eq.s32.totalorder %s31, 15
      %p128 = por %p126, %p127
      %p129 = scmp.ne.s32.totalorder %s120, %s121
      %p130 = scmp.eq.s32.totalorder %s31, 0
      %p131 = por %p129, %p130
      %p132 = scmp.ne.s32.totalorder %s120, %s121
      %p133 = scmp.eq.s32.totalorder %s32, 15
      %p134 = por %p132, %p133
      %p136 = scmp.ne.s32.totalorder %s121, %s135
      %p137 = scmp.eq.s32.totalorder %s32, 0
      %p138 = por %p136, %p137
      %s140 = sadd.s32 %s139, 1
      %p143 = scmp.eq.s32.totalorder %s26, 15
      %p144 = scmp.ne.s32.totalorder %s139, %s141
      %p145 = scmp.eq.s32.totalorder %s26, 0
      %p146 = por %p144, %p145
      %p147 = scmp.ne.s32.totalorder %s139, %s141
      %p148 = scmp.eq.s32.totalorder %s31, 15
      %p149 = por %p147, %p148
      %p150 = scmp.ne.s32.totalorder %s141, %s142
      %p151 = scmp.eq.s32.totalorder %s31, 0
      %p152 = por %p150, %p151
      %p153 = scmp.ne.s32.totalorder %s141, %s142
      %p154 = scmp.eq.s32.totalorder %s32, 15
      %p155 = por %p153, %p154
      %p157 = scmp.ne.s32.totalorder %s142, %s156
      %p158 = scmp.eq.s32.totalorder %s32, 0
      %p159 = por %p157, %p158
      %s161 = sadd.s32 %s160, 1
      %p164 = scmp.eq.s32.totalorder %s26, 15
      %p165 = scmp.ne.s32.totalorder %s160, %s162
      %p166 = scmp.eq.s32.totalorder %s26, 0
      %p167 = por %p165, %p166
      %p168 = scmp.ne.s32.totalorder %s160, %s162
      %p169 = scmp.eq.s32.totalorder %s31, 15
      %p170 = por %p168, %p169
      %p171 = scmp.ne.s32.totalorder %s162, %s163
      %p172 = scmp.eq.s32.totalorder %s31, 0
      %p173 = por %p171, %p172
      %p174 = scmp.ne.s32.totalorder %s162, %s163
      %p175 = scmp.eq.s32.totalorder %s32, 15
      %p176 = por %p174, %p175
      %p178 = scmp.ne.s32.totalorder %s163, %s177
      %p179 = scmp.eq.s32.totalorder %s32, 0
      %p180 = por %p178, %p179
      %s182 = sadd.s32 %s181, 1
      %p185 = scmp.eq.s32.totalorder %s26, 15
      %p186 = scmp.ne.s32.totalorder %s181, %s183
      %p187 = scmp.eq.s32.totalorder %s26, 0
      %p188 = por %p186, %p187
      %p189 = scmp.ne.s32.totalorder %s181, %s183
      %p190 = scmp.eq.s32.totalorder %s31, 15
      %p191 = por %p189, %p190
      %p192 = scmp.ne.s32.totalorder %s183, %s184
      %p193 = scmp.eq.s32.totalorder %s31, 0
      %p194 = por %p192, %p193
      %p195 = scmp.ne.s32.totalorder %s183, %s184
      %p196 = scmp.eq.s32.totalorder %s32, 15
      %p197 = por %p195, %p196
      %p199 = scmp.ne.s32.totalorder %s184, %s198
      %p200 = scmp.eq.s32.totalorder %s32, 0
      %p201 = por %p199, %p200
      %s203 = sadd.s32 %s202, 1
      %p206 = scmp.eq.s32.totalorder %s26, 15
      %p207 = scmp.ne.s32.totalorder %s202, %s204
      %p208 = scmp.eq.s32.totalorder %s26, 0
      %p209 = por %p207, %p208
      %p210 = scmp.ne.s32.totalorder %s202, %s204
      %p211 = scmp.eq.s32.totalorder %s31, 15
      %p212 = por %p210, %p211
      %p213 = scmp.ne.s32.totalorder %s204, %s205
      %p214 = scmp.eq.s32.totalorder %s31, 0
      %p215 = por %p213, %p214
      %p216 = scmp.ne.s32.totalorder %s204, %s205
      %p217 = scmp.eq.s32.totalorder %s32, 15
      %p218 = por %p216, %p217
      %p220 = scmp.ne.s32.totalorder %s205, %s219
      %p221 = scmp.eq.s32.totalorder %s32, 0
      %p222 = por %p220, %p221
      %s223 = ssub.s32 %s26, %s33
      %p224 = scmp.eq.s32.totalorder %s223, 0
      %s226 = sadd.s32 %s225, 1
      %s227 = scalar_select %p224, %s225, %s226
      %p230 = pneg %p224
      %p231 = scmp.eq.s32.totalorder %s26, 15
      %p232 = por %p230, %p231
      %p233 = scmp.ne.s32.totalorder %s225, %s228
      %p234 = scmp.eq.s32.totalorder %s26, 0
      %p235 = por %p233, %p234
      %p236 = scmp.ne.s32.totalorder %s225, %s228
      %p237 = scmp.eq.s32.totalorder %s31, 15
      %p238 = por %p236, %p237
      %p239 = scmp.ne.s32.totalorder %s228, %s229
      %p240 = scmp.eq.s32.totalorder %s31, 0
      %p241 = por %p239, %p240
      %p242 = scmp.ne.s32.totalorder %s228, %s229
      %p243 = scmp.eq.s32.totalorder %s32, 15
      %p244 = por %p242, %p243
      %p246 = scmp.ne.s32.totalorder %s229, %s245
      %p247 = scmp.eq.s32.totalorder %s32, 0
      %p248 = por %p246, %p247
      %s249 = ssub.s32 %s26, %s33
      %p250 = scmp.eq.s32.totalorder %s249, 0
      %s252 = sadd.s32 %s251, 1
      %s253 = scalar_select %p250, %s251, %s252
      %p256 = pneg %p250
      %p257 = scmp.eq.s32.totalorder %s26, 15
      %p258 = por %p256, %p257
      %p259 = scmp.ne.s32.totalorder %s251, %s254
      %p260 = scmp.eq.s32.totalorder %s26, 0
      %p261 = por %p259, %p260
      %p262 = scmp.ne.s32.totalorder %s251, %s254
      %p263 = scmp.eq.s32.totalorder %s31, 15
      %p264 = por %p262, %p263
      %p265 = scmp.ne.s32.totalorder %s254, %s255
      %p266 = scmp.eq.s32.totalorder %s31, 0
      %p267 = por %p265, %p266
      %p268 = scmp.ne.s32.totalorder %s254, %s255
      %p269 = scmp.eq.s32.totalorder %s32, 15
      %p270 = por %p268, %p269
      %p272 = scmp.ne.s32.totalorder %s255, %s271
      %p273 = scmp.eq.s32.totalorder %s32, 0
      %p274 = por %p272, %p273
      %s275 = ssub.s32 %s26, %s33
      %p276 = scmp.eq.s32.totalorder %s275, 0
      %s278 = sadd.s32 %s277, 1
      %s279 = scalar_select %p276, %s277, %s278
      %p282 = pneg %p276
      %p283 = scmp.eq.s32.totalorder %s26, 15
      %p284 = por %p282, %p283
      %p285 = scmp.ne.s32.totalorder %s277, %s280
      %p286 = scmp.eq.s32.totalorder %s26, 0
      %p287 = por %p285, %p286
      %p288 = scmp.ne.s32.totalorder %s277, %s280
      %p289 = scmp.eq.s32.totalorder %s31, 15
      %p290 = por %p288, %p289
      %p291 = scmp.ne.s32.totalorder %s280, %s281
      %p292 = scmp.eq.s32.totalorder %s31, 0
      %p293 = por %p291, %p292
      %p294 = scmp.ne.s32.totalorder %s280, %s281
      %p295 = scmp.eq.s32.totalorder %s32, 15
      %p296 = por %p294, %p295
      %p298 = scmp.ne.s32.totalorder %s281, %s297
      %p299 = scmp.eq.s32.totalorder %s32, 0
      %p300 = por %p298, %p299
      %s301 = ssub.s32 %s26, %s33
      %p302 = scmp.eq.s32.totalorder %s301, 0
      %s304 = sadd.s32 %s303, 1
      %s305 = scalar_select %p302, %s303, %s304
      %p308 = pneg %p302
      %p309 = scmp.eq.s32.totalorder %s26, 15
      %p310 = por %p308, %p309
      %p311 = scmp.ne.s32.totalorder %s303, %s306
      %p312 = scmp.eq.s32.totalorder %s26, 0
      %p313 = por %p311, %p312
      %p314 = scmp.ne.s32.totalorder %s303, %s306
      %p315 = scmp.eq.s32.totalorder %s31, 15
      %p316 = por %p314, %p315
      %p317 = scmp.ne.s32.totalorder %s306, %s307
      %p318 = scmp.eq.s32.totalorder %s31, 0
      %p319 = por %p317, %p318
      %p320 = scmp.ne.s32.totalorder %s306, %s307
      %p321 = scmp.eq.s32.totalorder %s32, 15
      %p322 = por %p320, %p321
      %p324 = scmp.ne.s32.totalorder %s307, %s323
      %p325 = scmp.eq.s32.totalorder %s32, 0
      %p326 = por %p324, %p325
      %p327 = scmp.le.s32.totalorder 1, %s26
      %p328 = scmp.lt.s32.totalorder %s26, 17
      %p329 = pnand %p327, %p328
      %p330 = pneg %p329
      // Predicated region
      $region9: #{tpu_custom_call.1} parent=5 // pred_check
        _
      $region10: #{tpu_custom_call.1} parent=5 // pred_check_branch
        %332 = sbr.rel (%p329) target = $region12
      $region11: #{tpu_custom_call.1} parent=5 // pred_region
        %s333 = ssub.s32 %s26, 1
        // Predicated region
        $region13: #{tpu_custom_call.1} parent=11 // pred_check
          %p334 = pneg %p47
        $region14: #{tpu_custom_call.1} parent=11 // pred_check_branch
          %336 = sbr.rel (%p334) target = $region16
        $region15: #{tpu_custom_call.1} parent=11 // pred_region
          %338 = vsyncadd [#allocation4], 0
          %s339 = sshll.u32 %s0, 4
          %s340 = int_to_ptr.hbm [resolvable:$true] %s339
          %s341 = sshll.u32 [#allocation3], 4
          %s342 = int_to_ptr.vmem [resolvable:$true] %s341
          %347 = dma.hbm_to_vmem [thread:$0]  %s340, 2048, %s342, [#allocation4], 128, 128, 8
        $region16: #{tpu_custom_call.1} parent=11 // pred_fallthru
          _
        // Predicated region
        $region17: #{tpu_custom_call.1} parent=11 // pred_check
          %p348 = pneg %p68
        $region18: #{tpu_custom_call.1} parent=11 // pred_check_branch
          %350 = sbr.rel (%p348) target = $region20
        $region19: #{tpu_custom_call.1} parent=11 // pred_region
          %352 = vsyncadd [#allocation7], 0
          %s353 = sshll.u32 %s1, 4
          %s354 = int_to_ptr.hbm [resolvable:$true] %s353
          %s355 = sshll.u32 [#allocation6], 4
          %s356 = int_to_ptr.vmem [resolvable:$true] %s355
          %361 = dma.hbm_to_vmem [thread:$0]  %s354, 2048, %s356, [#allocation7], 128, 128, 8
        $region20: #{tpu_custom_call.1} parent=11 // pred_fallthru
          _
        // Predicated region
        $region21: #{tpu_custom_call.1} parent=11 // pred_check
          %p362 = pneg %p89
        $region22: #{tpu_custom_call.1} parent=11 // pred_check_branch
          %364 = sbr.rel (%p362) target = $region24
        $region23: #{tpu_custom_call.1} parent=11 // pred_region
          _
        $region24: #{tpu_custom_call.1} parent=11 // pred_fallthru
          _
        // Predicated region
        $region25: #{tpu_custom_call.1} parent=11 // pred_check
          %p365 = pneg %p110
        $region26: #{tpu_custom_call.1} parent=11 // pred_check_branch
          %367 = sbr.rel (%p365) target = $region28
        $region27: #{tpu_custom_call.1} parent=11 // pred_region
          %369 = vsyncadd [#allocation7], 0
          %s370 = sshll.u32 %s3, 4
          %s371 = int_to_ptr.hbm [resolvable:$true] %s370
          %s372 = sshll.u32 [#allocation8], 4
          %s373 = int_to_ptr.vmem [resolvable:$true] %s372
          %378 = dma.hbm_to_vmem [thread:$0]  %s371, 2048, %s373, [#allocation7], 128, 128, 8
        $region28: #{tpu_custom_call.1} parent=11 // pred_fallthru
          _
        // Predicated region
        $region29: #{tpu_custom_call.1} parent=11 // pred_check
          %p379 = pneg %p131
        $region30: #{tpu_custom_call.1} parent=11 // pred_check_branch
          %381 = sbr.rel (%p379) target = $region32
        $region31: #{tpu_custom_call.1} parent=11 // pred_region
          _
        $region32: #{tpu_custom_call.1} parent=11 // pred_fallthru
          _
        // Predicated region
        $region33: #{tpu_custom_call.1} parent=11 // pred_check
          %p382 = pneg %p152
        $region34: #{tpu_custom_call.1} parent=11 // pred_check_branch
          %384 = sbr.rel (%p382) target = $region36
        $region35: #{tpu_custom_call.1} parent=11 // pred_region
          %386 = vsyncadd [#allocation10], 0
          %s387 = sshll.u32 %s5, 4
          %s388 = int_to_ptr.hbm [resolvable:$true] %s387
          %s389 = sshll.u32 [#allocation9], 4
          %s390 = int_to_ptr.vmem [resolvable:$true] %s389
          %395 = dma.hbm_to_vmem [thread:$0]  %s388, 2048, %s390, [#allocation10], 128, 128, 8
        $region36: #{tpu_custom_call.1} parent=11 // pred_fallthru
          _
        // Predicated region
        $region37: #{tpu_custom_call.1} parent=11 // pred_check
          %p396 = pneg %p173
        $region38: #{tpu_custom_call.1} parent=11 // pred_check_branch
          %398 = sbr.rel (%p396) target = $region40
        $region39: #{tpu_custom_call.1} parent=11 // pred_region
          _
        $region40: #{tpu_custom_call.1} parent=11 // pred_fallthru
          _
        // Predicated region
        $region41: #{tpu_custom_call.1} parent=11 // pred_check
          %p399 = pneg %p194
        $region42: #{tpu_custom_call.1} parent=11 // pred_check_branch
          %401 = sbr.rel (%p399) target = $region44
        $region43: #{tpu_custom_call.1} parent=11 // pred_region
          _
        $region44: #{tpu_custom_call.1} parent=11 // pred_fallthru
          _
        // Predicated region
        $region45: #{tpu_custom_call.1} parent=11 // pred_check
          %p402 = pneg %p215
        $region46: #{tpu_custom_call.1} parent=11 // pred_check_branch
          %404 = sbr.rel (%p402) target = $region48
        $region47: #{tpu_custom_call.1} parent=11 // pred_region
          _
        $region48: #{tpu_custom_call.1} parent=11 // pred_fallthru
          _
      $region12: #{tpu_custom_call.1} parent=5 // pred_fallthru
        _
      %p405 = scmp.lt.s32.totalorder %s26, 16
      // Predicated region
      $region49: #{tpu_custom_call.1} parent=5 // pred_check
        %p406 = pneg %p405
      $region50: #{tpu_custom_call.1} parent=5 // pred_check_branch
        %408 = sbr.rel (%p406) target = $region52
      $region51: #{tpu_custom_call.1} parent=5 // pred_region
        // Predicated region
        $region53: #{tpu_custom_call.1} parent=51 // pred_check
          %p409 = pneg %p235
        $region54: #{tpu_custom_call.1} parent=51 // pred_check_branch
          %411 = sbr.rel (%p409) target = $region56
        $region55: #{tpu_custom_call.1} parent=51 // pred_region
          %s412 = sand.u32 %s26, 1
          %s413 = scalar_lea.sflag [#allocation4], %s412
          %s414 = sand.u32 %s225, 1
          %s415 = smul.addr %s414, 128
          %s416 = scalar_lea.vmem [#allocation11], %s415
          %418 = vsyncadd %s413, 0
          %s419 = smul.addr %s26, 16
          %s420 = smul.addr %s419, 8
          %s421 = scalar_lea.hbm %s9, %s420
          %s422 = sshll.u32 %s421, 4
          %s423 = int_to_ptr.hbm [resolvable:$true] %s422
          %s424 = sshll.u32 %s416, 4
          %s425 = int_to_ptr.vmem [resolvable:$true] %s424
          %430 = dma.hbm_to_vmem [thread:$0]  %s423, 2048, %s425, %s413, 128, 128, 8
        $region56: #{tpu_custom_call.1} parent=51 // pred_fallthru
          _
        // Predicated region
        $region57: #{tpu_custom_call.1} parent=51 // pred_check
          %p431 = pneg %p261
        $region58: #{tpu_custom_call.1} parent=51 // pred_check_branch
          %433 = sbr.rel (%p431) target = $region60
        $region59: #{tpu_custom_call.1} parent=51 // pred_region
          %s434 = sand.u32 %s26, 1
          %s435 = scalar_lea.sflag [#allocation4], %s434
          %s436 = sand.u32 %s251, 1
          %s437 = smul.addr %s436, 128
          %s438 = scalar_lea.vmem [#allocation12], %s437
          %440 = vsyncadd %s435, 0
          %s441 = smul.addr %s26, 16
          %s442 = smul.addr %s441, 8
          %s443 = scalar_lea.hbm %s10, %s442
          %s444 = sshll.u32 %s443, 4
          %s445 = int_to_ptr.hbm [resolvable:$true] %s444
          %s446 = sshll.u32 %s438, 4
          %s447 = int_to_ptr.vmem [resolvable:$true] %s446
          %452 = dma.hbm_to_vmem [thread:$0]  %s445, 2048, %s447, %s435, 128, 128, 8
        $region60: #{tpu_custom_call.1} parent=51 // pred_fallthru
          _
        // Predicated region
        $region61: #{tpu_custom_call.1} parent=51 // pred_check
          %p453 = pneg %p287
        $region62: #{tpu_custom_call.1} parent=51 // pred_check_branch
          %455 = sbr.rel (%p453) target = $region64
        $region63: #{tpu_custom_call.1} parent=51 // pred_region
          %s456 = sand.u32 %s26, 1
          %s457 = scalar_lea.sflag [#allocation4], %s456
          %s458 = sand.u32 %s277, 1
          %s459 = smul.addr %s458, 128
          %s460 = scalar_lea.vmem [#allocation13], %s459
          %462 = vsyncadd %s457, 0
          %s463 = smul.addr %s26, 16
          %s464 = smul.addr %s463, 8
          %s465 = scalar_lea.hbm %s11, %s464
          %s466 = sshll.u32 %s465, 4
          %s467 = int_to_ptr.hbm [resolvable:$true] %s466
          %s468 = sshll.u32 %s460, 4
          %s469 = int_to_ptr.vmem [resolvable:$true] %s468
          %474 = dma.hbm_to_vmem [thread:$0]  %s467, 2048, %s469, %s457, 128, 128, 8
        $region64: #{tpu_custom_call.1} parent=51 // pred_fallthru
          _
      $region52: #{tpu_custom_call.1} parent=5 // pred_fallthru
        _
      %p475 = scmp.le.s32.totalorder 1, %s26
      %p476 = scmp.lt.s32.totalorder %s26, 17
      %p477 = pnand %p475, %p476
      %p478 = pneg %p477
      // Predicated region
      $region65: #{tpu_custom_call.1} parent=5 // pred_check
        _
      $region66: #{tpu_custom_call.1} parent=5 // pred_check_branch
        %480 = sbr.rel (%p477) target = $region68
      $region67: #{tpu_custom_call.1} parent=5 // pred_region
        %s481 = ssub.s32 %s26, 1
        // Predicated region
        $region69: #{tpu_custom_call.1} parent=67 // pred_check
          %p482 = pneg %p47
        $region70: #{tpu_custom_call.1} parent=67 // pred_check_branch
          %484 = sbr.rel (%p482) target = $region72
        $region71: #{tpu_custom_call.1} parent=67 // pred_region
          %486 = dma.done [#allocation4], 2048
        $region72: #{tpu_custom_call.1} parent=67 // pred_fallthru
          _
        // Predicated region
        $region73: #{tpu_custom_call.1} parent=67 // pred_check
          %p487 = pneg %p68
        $region74: #{tpu_custom_call.1} parent=67 // pred_check_branch
          %489 = sbr.rel (%p487) target = $region76
        $region75: #{tpu_custom_call.1} parent=67 // pred_region
          %491 = dma.done [#allocation7], 2048
        $region76: #{tpu_custom_call.1} parent=67 // pred_fallthru
          _
        // Predicated region
        $region77: #{tpu_custom_call.1} parent=67 // pred_check
          %p492 = pneg %p110
        $region78: #{tpu_custom_call.1} parent=67 // pred_check_branch
          %494 = sbr.rel (%p492) target = $region80
        $region79: #{tpu_custom_call.1} parent=67 // pred_region
          %496 = dma.done [#allocation7], 2048
        $region80: #{tpu_custom_call.1} parent=67 // pred_fallthru
          _
        // Predicated region
        $region81: #{tpu_custom_call.1} parent=67 // pred_check
          %p497 = pneg %p152
        $region82: #{tpu_custom_call.1} parent=67 // pred_check_branch
          %499 = sbr.rel (%p497) target = $region84
        $region83: #{tpu_custom_call.1} parent=67 // pred_region
          %501 = dma.done [#allocation10], 2048
        $region84: #{tpu_custom_call.1} parent=67 // pred_fallthru
          _
        %s502 = sand.u32 %s31, 1
        %s503 = scalar_lea.sflag [#allocation4], %s502
        %s504 = sand.u32 %s228, 1
        %s505 = smul.addr %s504, 128
        %s506 = scalar_lea.vmem [#allocation11], %s505
        // Predicated region
        $region85: #{tpu_custom_call.1} parent=67 // pred_check
          %p507 = pneg %p241
        $region86: #{tpu_custom_call.1} parent=67 // pred_check_branch
          %509 = sbr.rel (%p507) target = $region88
        $region87: #{tpu_custom_call.1} parent=67 // pred_region
          %511 = dma.done %s503, 2048
        $region88: #{tpu_custom_call.1} parent=67 // pred_fallthru
          _
        %s512 = sand.u32 %s31, 1
        %s513 = scalar_lea.sflag [#allocation4], %s512
        %s514 = sand.u32 %s254, 1
        %s515 = smul.addr %s514, 128
        %s516 = scalar_lea.vmem [#allocation12], %s515
        // Predicated region
        $region89: #{tpu_custom_call.1} parent=67 // pred_check
          %p517 = pneg %p267
        $region90: #{tpu_custom_call.1} parent=67 // pred_check_branch
          %519 = sbr.rel (%p517) target = $region92
        $region91: #{tpu_custom_call.1} parent=67 // pred_region
          %521 = dma.done %s513, 2048
        $region92: #{tpu_custom_call.1} parent=67 // pred_fallthru
          _
        %s522 = sand.u32 %s31, 1
        %s523 = scalar_lea.sflag [#allocation4], %s522
        %s524 = sand.u32 %s280, 1
        %s525 = smul.addr %s524, 128
        %s526 = scalar_lea.vmem [#allocation13], %s525
        // Predicated region
        $region93: #{tpu_custom_call.1} parent=67 // pred_check
          %p527 = pneg %p293
        $region94: #{tpu_custom_call.1} parent=67 // pred_check_branch
          %529 = sbr.rel (%p527) target = $region96
        $region95: #{tpu_custom_call.1} parent=67 // pred_region
          %531 = dma.done %s523, 2048
        $region96: #{tpu_custom_call.1} parent=67 // pred_fallthru
          _
        %p532 = pneg %p47
        %p533 = pneg %p44
        %p534 = pneg %p68
        %p535 = pneg %p65
        %p536 = pneg %p89
        %p537 = pneg %p86
        %p538 = pneg %p110
        %p539 = pneg %p107
        %p540 = pneg %p131
        %p541 = pneg %p128
        %p542 = pneg %p152
        %p543 = pneg %p149
        %p544 = pneg %p173
        %p545 = pneg %p170
        %p546 = pneg %p194
        %p547 = pneg %p191
        %p548 = pneg %p215
        %p549 = pneg %p212
        %s550 = sand.u32 %s31, 1
        %s551 = scalar_lea.sflag [#allocation4], %s550
        %s552 = sand.u32 %s228, 1
        %s553 = smul.addr %s552, 128
        %s554 = scalar_lea.vmem [#allocation11], %s553
        %p555 = pneg %p241
        %p556 = pneg %p238
        %s557 = sand.u32 %s31, 1
        %s558 = scalar_lea.sflag [#allocation4], %s557
        %s559 = sand.u32 %s254, 1
        %s560 = smul.addr %s559, 128
        %s561 = scalar_lea.vmem [#allocation12], %s560
        %p562 = pneg %p267
        %p563 = pneg %p264
        %s564 = sand.u32 %s31, 1
        %s565 = scalar_lea.sflag [#allocation4], %s564
        %s566 = sand.u32 %s280, 1
        %s567 = smul.addr %s566, 128
        %s568 = scalar_lea.vmem [#allocation13], %s567
        %p569 = pneg %p293
        %p570 = pneg %p290
        %p571 = pneg %p319
        %p572 = pneg %p316
        %s573 = sand.u32 %s306, 1
        %s574 = scalar_lea.sflag [#allocation5], %s573
        %s575 = sand.u32 %s306, 1
        %s576 = scalar_lea.vmem [#allocation14], %s575
        %v577 = vld [vmem:[#allocation3] sm:$0xff]
        %v578 = vld [vmem:[#allocation3 + $0x8] sm:$0xff]
        %v579 = vld [vmem:[#allocation3 + $0x10] sm:$0xff]
        %v580 = vld [vmem:[#allocation3 + $0x18] sm:$0xff]
        %v581 = vld [vmem:[#allocation3 + $0x20] sm:$0xff]
        %v582 = vld [vmem:[#allocation3 + $0x28] sm:$0xff]
        %v583 = vld [vmem:[#allocation3 + $0x30] sm:$0xff]
        %v584 = vld [vmem:[#allocation3 + $0x38] sm:$0xff]
        %v585 = vld [vmem:[#allocation3 + $0x40] sm:$0xff]
        %v586 = vld [vmem:[#allocation3 + $0x48] sm:$0xff]
        %v587 = vld [vmem:[#allocation3 + $0x50] sm:$0xff]
        %v588 = vld [vmem:[#allocation3 + $0x58] sm:$0xff]
        %v589 = vld [vmem:[#allocation3 + $0x60] sm:$0xff]
        %v590 = vld [vmem:[#allocation3 + $0x68] sm:$0xff]
        %v591 = vld [vmem:[#allocation3 + $0x70] sm:$0xff]
        %v592 = vld [vmem:[#allocation3 + $0x78] sm:$0xff]
        %v593 = vld [vmem:[#allocation6] sm:$0xff]
        %v594 = vld [vmem:[#allocation6 + $0x8] sm:$0xff]
        %v595 = vld [vmem:[#allocation6 + $0x10] sm:$0xff]
        %v596 = vld [vmem:[#allocation6 + $0x18] sm:$0xff]
        %v597 = vld [vmem:[#allocation6 + $0x20] sm:$0xff]
        %v598 = vld [vmem:[#allocation6 + $0x28] sm:$0xff]
        %v599 = vld [vmem:[#allocation6 + $0x30] sm:$0xff]
        %v600 = vld [vmem:[#allocation6 + $0x38] sm:$0xff]
        %v601 = vld [vmem:[#allocation6 + $0x40] sm:$0xff]
        %v602 = vld [vmem:[#allocation6 + $0x48] sm:$0xff]
        %v603 = vld [vmem:[#allocation6 + $0x50] sm:$0xff]
        %v604 = vld [vmem:[#allocation6 + $0x58] sm:$0xff]
        %v605 = vld [vmem:[#allocation6 + $0x60] sm:$0xff]
        %v606 = vld [vmem:[#allocation6 + $0x68] sm:$0xff]
        %v607 = vld [vmem:[#allocation6 + $0x70] sm:$0xff]
        %v608 = vld [vmem:[#allocation6 + $0x78] sm:$0xff]
        %v609 = vld [vmem:[%s2] sm:$0x1]
        %v611 = vperm.slane %v609, 0
        %613 = vmatpush.msra.mxu0 %v608
        %614 = vmatpush.msra.mxu0 %v607
        %615 = vmatpush.msra.mxu0 %v606
        %616 = vmatpush.msra.mxu0 %v605
        %617 = vmatpush.msra.mxu0 %v604
        %618 = vmatpush.msra.mxu0 %v603
        %619 = vmatpush.msra.mxu0 %v602
        %620 = vmatpush.msra.mxu0 %v601
        %621 = vmatpush.msra.mxu0 %v600
        %622 = vmatpush.msra.mxu0 %v599
        %623 = vmatpush.msra.mxu0 %v598
        %624 = vmatpush.msra.mxu0 %v597
        %625 = vmatpush.msra.mxu0 %v596
        %626 = vmatpush.msra.mxu0 %v595
        %627 = vmatpush.msra.mxu0 %v594
        %628 = vmatpush.msra.mxu0 %v593
        %629 = vmatmul.f32.gmra.mxu0 %v577
        %v630 = vpop.f32.mrf.mxu0
        %v631 = vadd.f32 %v611, %v630
        %632 = vmatmul.f32.gmra.mxu0 %v578
        %v633 = vpop.f32.mrf.mxu0
        %v634 = vadd.f32 %v611, %v633
        %635 = vmatmul.f32.gmra.mxu0 %v579
        %v636 = vpop.f32.mrf.mxu0
        %v637 = vadd.f32 %v611, %v636
        %638 = vmatmul.f32.gmra.mxu0 %v580
        %v639 = vpop.f32.mrf.mxu0
        %v640 = vadd.f32 %v611, %v639
        %641 = vmatmul.f32.gmra.mxu0 %v581
        %v642 = vpop.f32.mrf.mxu0
        %v643 = vadd.f32 %v611, %v642
        %644 = vmatmul.f32.gmra.mxu0 %v582
        %v645 = vpop.f32.mrf.mxu0
        %v646 = vadd.f32 %v611, %v645
        %647 = vmatmul.f32.gmra.mxu0 %v583
        %v648 = vpop.f32.mrf.mxu0
        %v649 = vadd.f32 %v611, %v648
        %650 = vmatmul.f32.gmra.mxu0 %v584
        %v651 = vpop.f32.mrf.mxu0
        %v652 = vadd.f32 %v611, %v651
        %653 = vmatmul.f32.gmra.mxu0 %v585
        %v654 = vpop.f32.mrf.mxu0
        %v655 = vadd.f32 %v611, %v654
        %656 = vmatmul.f32.gmra.mxu0 %v586
        %v657 = vpop.f32.mrf.mxu0
        %v658 = vadd.f32 %v611, %v657
        %659 = vmatmul.f32.gmra.mxu0 %v587
        %v660 = vpop.f32.mrf.mxu0
        %v661 = vadd.f32 %v611, %v660
        %662 = vmatmul.f32.gmra.mxu0 %v588
        %v663 = vpop.f32.mrf.mxu0
        %v664 = vadd.f32 %v611, %v663
        %665 = vmatmul.f32.gmra.mxu0 %v589
        %v666 = vpop.f32.mrf.mxu0
        %v667 = vadd.f32 %v611, %v666
        %668 = vmatmul.f32.gmra.mxu0 %v590
        %v669 = vpop.f32.mrf.mxu0
        %v670 = vadd.f32 %v611, %v669
        %671 = vmatmul.f32.gmra.mxu0 %v591
        %v672 = vpop.f32.mrf.mxu0
        %v673 = vadd.f32 %v611, %v672
        %674 = vmatmul.f32.gmra.mxu0 %v592
        %v675 = vpop.f32.mrf.mxu0
        %v676 = vadd.f32 %v611, %v675
        %677 = vdwg.mxu0
        %v678 = vtanh.pop %v631
        %v679 = vtanh.pop %v634
        %v680 = vtanh.pop %v637
        %v681 = vtanh.pop %v640
        %v682 = vtanh.pop %v643
        %v683 = vtanh.pop %v646
        %v684 = vtanh.pop %v649
        %v685 = vtanh.pop %v652
        %v686 = vtanh.pop %v655
        %v687 = vtanh.pop %v658
        %v688 = vtanh.pop %v661
        %v689 = vtanh.pop %v664
        %v690 = vtanh.pop %v667
        %v691 = vtanh.pop %v670
        %v692 = vtanh.pop %v673
        %v693 = vtanh.pop %v676
        %v694 = vld [vmem:[%s506] sm:$0xff]
        %v695 = vld [vmem:[%s506 + $0x8] sm:$0xff]
        %v696 = vld [vmem:[%s506 + $0x10] sm:$0xff]
        %v697 = vld [vmem:[%s506 + $0x18] sm:$0xff]
        %v698 = vld [vmem:[%s506 + $0x20] sm:$0xff]
        %v699 = vld [vmem:[%s506 + $0x28] sm:$0xff]
        %v700 = vld [vmem:[%s506 + $0x30] sm:$0xff]
        %v701 = vld [vmem:[%s506 + $0x38] sm:$0xff]
        %v702 = vld [vmem:[%s506 + $0x40] sm:$0xff]
        %v703 = vld [vmem:[%s506 + $0x48] sm:$0xff]
        %v704 = vld [vmem:[%s506 + $0x50] sm:$0xff]
        %v705 = vld [vmem:[%s506 + $0x58] sm:$0xff]
        %v706 = vld [vmem:[%s506 + $0x60] sm:$0xff]
        %v707 = vld [vmem:[%s506 + $0x68] sm:$0xff]
        %v708 = vld [vmem:[%s506 + $0x70] sm:$0xff]
        %v709 = vld [vmem:[%s506 + $0x78] sm:$0xff]
        %v710 = vmul.f32 %v678, %v694
        %v711 = vmul.f32 %v679, %v695
        %v712 = vmul.f32 %v680, %v696
        %v713 = vmul.f32 %v681, %v697
        %v714 = vmul.f32 %v682, %v698
        %v715 = vmul.f32 %v683, %v699
        %v716 = vmul.f32 %v684, %v700
        %v717 = vmul.f32 %v685, %v701
        %v718 = vmul.f32 %v686, %v702
        %v719 = vmul.f32 %v687, %v703
        %v720 = vmul.f32 %v688, %v704
        %v721 = vmul.f32 %v689, %v705
        %v722 = vmul.f32 %v690, %v706
        %v723 = vmul.f32 %v691, %v707
        %v724 = vmul.f32 %v692, %v708
        %v725 = vmul.f32 %v693, %v709
        %v726 = vld [vmem:[#allocation8] sm:$0xff]
        %v727 = vld [vmem:[#allocation8 + $0x8] sm:$0xff]
        %v728 = vld [vmem:[#allocation8 + $0x10] sm:$0xff]
        %v729 = vld [vmem:[#allocation8 + $0x18] sm:$0xff]
        %v730 = vld [vmem:[#allocation8 + $0x20] sm:$0xff]
        %v731 = vld [vmem:[#allocation8 + $0x28] sm:$0xff]
        %v732 = vld [vmem:[#allocation8 + $0x30] sm:$0xff]
        %v733 = vld [vmem:[#allocation8 + $0x38] sm:$0xff]
        %v734 = vld [vmem:[#allocation8 + $0x40] sm:$0xff]
        %v735 = vld [vmem:[#allocation8 + $0x48] sm:$0xff]
        %v736 = vld [vmem:[#allocation8 + $0x50] sm:$0xff]
        %v737 = vld [vmem:[#allocation8 + $0x58] sm:$0xff]
        %v738 = vld [vmem:[#allocation8 + $0x60] sm:$0xff]
        %v739 = vld [vmem:[#allocation8 + $0x68] sm:$0xff]
        %v740 = vld [vmem:[#allocation8 + $0x70] sm:$0xff]
        %v741 = vld [vmem:[#allocation8 + $0x78] sm:$0xff]
        %v742 = vld [vmem:[%s4] sm:$0x1]
        %v744 = vperm.slane %v742, 0
        %746 = vmatpush.msra.mxu0 %v741
        %747 = vmatpush.msra.mxu0 %v740
        %748 = vmatpush.msra.mxu0 %v739
        %749 = vmatpush.msra.mxu0 %v738
        %750 = vmatpush.msra.mxu0 %v737
        %751 = vmatpush.msra.mxu0 %v736
        %752 = vmatpush.msra.mxu0 %v735
        %753 = vmatpush.msra.mxu0 %v734
        %754 = vmatpush.msra.mxu0 %v733
        %755 = vmatpush.msra.mxu0 %v732
        %756 = vmatpush.msra.mxu0 %v731
        %757 = vmatpush.msra.mxu0 %v730
        %758 = vmatpush.msra.mxu0 %v729
        %759 = vmatpush.msra.mxu0 %v728
        %760 = vmatpush.msra.mxu0 %v727
        %761 = vmatpush.msra.mxu0 %v726
        %762 = vmatmul.f32.gmra.mxu0 %v710
        %v763 = vpop.f32.mrf.mxu0
        %v764 = vadd.f32 %v744, %v763
        %765 = vmatmul.f32.gmra.mxu0 %v711
        %v766 = vpop.f32.mrf.mxu0
        %v767 = vadd.f32 %v744, %v766
        %768 = vmatmul.f32.gmra.mxu0 %v712
        %v769 = vpop.f32.mrf.mxu0
        %v770 = vadd.f32 %v744, %v769
        %771 = vmatmul.f32.gmra.mxu0 %v713
        %v772 = vpop.f32.mrf.mxu0
        %v773 = vadd.f32 %v744, %v772
        %774 = vmatmul.f32.gmra.mxu0 %v714
        %v775 = vpop.f32.mrf.mxu0
        %v776 = vadd.f32 %v744, %v775
        %777 = vmatmul.f32.gmra.mxu0 %v715
        %v778 = vpop.f32.mrf.mxu0
        %v779 = vadd.f32 %v744, %v778
        %780 = vmatmul.f32.gmra.mxu0 %v716
        %v781 = vpop.f32.mrf.mxu0
        %v782 = vadd.f32 %v744, %v781
        %783 = vmatmul.f32.gmra.mxu0 %v717
        %v784 = vpop.f32.mrf.mxu0
        %v785 = vadd.f32 %v744, %v784
        %786 = vmatmul.f32.gmra.mxu0 %v718
        %v787 = vpop.f32.mrf.mxu0
        %v788 = vadd.f32 %v744, %v787
        %789 = vmatmul.f32.gmra.mxu0 %v719
        %v790 = vpop.f32.mrf.mxu0
        %v791 = vadd.f32 %v744, %v790
        %792 = vmatmul.f32.gmra.mxu0 %v720
        %v793 = vpop.f32.mrf.mxu0
        %v794 = vadd.f32 %v744, %v793
        %795 = vmatmul.f32.gmra.mxu0 %v721
        %v796 = vpop.f32.mrf.mxu0
        %v797 = vadd.f32 %v744, %v796
        %798 = vmatmul.f32.gmra.mxu0 %v722
        %v799 = vpop.f32.mrf.mxu0
        %v800 = vadd.f32 %v744, %v799
        %801 = vmatmul.f32.gmra.mxu0 %v723
        %v802 = vpop.f32.mrf.mxu0
        %v803 = vadd.f32 %v744, %v802
        %804 = vmatmul.f32.gmra.mxu0 %v724
        %v805 = vpop.f32.mrf.mxu0
        %v806 = vadd.f32 %v744, %v805
        %807 = vmatmul.f32.gmra.mxu0 %v725
        %v808 = vpop.f32.mrf.mxu0
        %v809 = vadd.f32 %v744, %v808
        %810 = vdwg.mxu0
        %v811 = vtanh.pop %v764
        %v812 = vtanh.pop %v767
        %v813 = vtanh.pop %v770
        %v814 = vtanh.pop %v773
        %v815 = vtanh.pop %v776
        %v816 = vtanh.pop %v779
        %v817 = vtanh.pop %v782
        %v818 = vtanh.pop %v785
        %v819 = vtanh.pop %v788
        %v820 = vtanh.pop %v791
        %v821 = vtanh.pop %v794
        %v822 = vtanh.pop %v797
        %v823 = vtanh.pop %v800
        %v824 = vtanh.pop %v803
        %v825 = vtanh.pop %v806
        %v826 = vtanh.pop %v809
        %v827 = vld [vmem:[%s516] sm:$0xff]
        %v828 = vld [vmem:[%s516 + $0x8] sm:$0xff]
        %v829 = vld [vmem:[%s516 + $0x10] sm:$0xff]
        %v830 = vld [vmem:[%s516 + $0x18] sm:$0xff]
        %v831 = vld [vmem:[%s516 + $0x20] sm:$0xff]
        %v832 = vld [vmem:[%s516 + $0x28] sm:$0xff]
        %v833 = vld [vmem:[%s516 + $0x30] sm:$0xff]
        %v834 = vld [vmem:[%s516 + $0x38] sm:$0xff]
        %v835 = vld [vmem:[%s516 + $0x40] sm:$0xff]
        %v836 = vld [vmem:[%s516 + $0x48] sm:$0xff]
        %v837 = vld [vmem:[%s516 + $0x50] sm:$0xff]
        %v838 = vld [vmem:[%s516 + $0x58] sm:$0xff]
        %v839 = vld [vmem:[%s516 + $0x60] sm:$0xff]
        %v840 = vld [vmem:[%s516 + $0x68] sm:$0xff]
        %v841 = vld [vmem:[%s516 + $0x70] sm:$0xff]
        %v842 = vld [vmem:[%s516 + $0x78] sm:$0xff]
        %v843 = vmul.f32 %v811, %v827
        %v844 = vmul.f32 %v812, %v828
        %v845 = vmul.f32 %v813, %v829
        %v846 = vmul.f32 %v814, %v830
        %v847 = vmul.f32 %v815, %v831
        %v848 = vmul.f32 %v816, %v832
        %v849 = vmul.f32 %v817, %v833
        %v850 = vmul.f32 %v818, %v834
        %v851 = vmul.f32 %v819, %v835
        %v852 = vmul.f32 %v820, %v836
        %v853 = vmul.f32 %v821, %v837
        %v854 = vmul.f32 %v822, %v838
        %v855 = vmul.f32 %v823, %v839
        %v856 = vmul.f32 %v824, %v840
        %v857 = vmul.f32 %v825, %v841
        %v858 = vmul.f32 %v826, %v842
        %v859 = vld [vmem:[#allocation9] sm:$0xff]
        %v860 = vld [vmem:[#allocation9 + $0x8] sm:$0xff]
        %v861 = vld [vmem:[#allocation9 + $0x10] sm:$0xff]
        %v862 = vld [vmem:[#allocation9 + $0x18] sm:$0xff]
        %v863 = vld [vmem:[#allocation9 + $0x20] sm:$0xff]
        %v864 = vld [vmem:[#allocation9 + $0x28] sm:$0xff]
        %v865 = vld [vmem:[#allocation9 + $0x30] sm:$0xff]
        %v866 = vld [vmem:[#allocation9 + $0x38] sm:$0xff]
        %v867 = vld [vmem:[#allocation9 + $0x40] sm:$0xff]
        %v868 = vld [vmem:[#allocation9 + $0x48] sm:$0xff]
        %v869 = vld [vmem:[#allocation9 + $0x50] sm:$0xff]
        %v870 = vld [vmem:[#allocation9 + $0x58] sm:$0xff]
        %v871 = vld [vmem:[#allocation9 + $0x60] sm:$0xff]
        %v872 = vld [vmem:[#allocation9 + $0x68] sm:$0xff]
        %v873 = vld [vmem:[#allocation9 + $0x70] sm:$0xff]
        %v874 = vld [vmem:[#allocation9 + $0x78] sm:$0xff]
        %v875 = vld [vmem:[%s6] sm:$0x1]
        %v877 = vperm.slane %v875, 0
        %879 = vmatpush.msra.mxu0 %v874
        %880 = vmatpush.msra.mxu0 %v873
        %881 = vmatpush.msra.mxu0 %v872
        %882 = vmatpush.msra.mxu0 %v871
        %883 = vmatpush.msra.mxu0 %v870
        %884 = vmatpush.msra.mxu0 %v869
        %885 = vmatpush.msra.mxu0 %v868
        %886 = vmatpush.msra.mxu0 %v867
        %887 = vmatpush.msra.mxu0 %v866
        %888 = vmatpush.msra.mxu0 %v865
        %889 = vmatpush.msra.mxu0 %v864
        %890 = vmatpush.msra.mxu0 %v863
        %891 = vmatpush.msra.mxu0 %v862
        %892 = vmatpush.msra.mxu0 %v861
        %893 = vmatpush.msra.mxu0 %v860
        %894 = vmatpush.msra.mxu0 %v859
        %895 = vmatmul.f32.gmra.mxu0 %v843
        %v896 = vpop.f32.mrf.mxu0
        %v897 = vadd.f32 %v877, %v896
        %898 = vmatmul.f32.gmra.mxu0 %v844
        %v899 = vpop.f32.mrf.mxu0
        %v900 = vadd.f32 %v877, %v899
        %901 = vmatmul.f32.gmra.mxu0 %v845
        %v902 = vpop.f32.mrf.mxu0
        %v903 = vadd.f32 %v877, %v902
        %904 = vmatmul.f32.gmra.mxu0 %v846
        %v905 = vpop.f32.mrf.mxu0
        %v906 = vadd.f32 %v877, %v905
        %907 = vmatmul.f32.gmra.mxu0 %v847
        %v908 = vpop.f32.mrf.mxu0
        %v909 = vadd.f32 %v877, %v908
        %910 = vmatmul.f32.gmra.mxu0 %v848
        %v911 = vpop.f32.mrf.mxu0
        %v912 = vadd.f32 %v877, %v911
        %913 = vmatmul.f32.gmra.mxu0 %v849
        %v914 = vpop.f32.mrf.mxu0
        %v915 = vadd.f32 %v877, %v914
        %916 = vmatmul.f32.gmra.mxu0 %v850
        %v917 = vpop.f32.mrf.mxu0
        %v918 = vadd.f32 %v877, %v917
        %919 = vmatmul.f32.gmra.mxu0 %v851
        %v920 = vpop.f32.mrf.mxu0
        %v921 = vadd.f32 %v877, %v920
        %922 = vmatmul.f32.gmra.mxu0 %v852
        %v923 = vpop.f32.mrf.mxu0
        %v924 = vadd.f32 %v877, %v923
        %925 = vmatmul.f32.gmra.mxu0 %v853
        %v926 = vpop.f32.mrf.mxu0
        %v927 = vadd.f32 %v877, %v926
        %928 = vmatmul.f32.gmra.mxu0 %v854
        %v929 = vpop.f32.mrf.mxu0
        %v930 = vadd.f32 %v877, %v929
        %931 = vmatmul.f32.gmra.mxu0 %v855
        %v932 = vpop.f32.mrf.mxu0
        %v933 = vadd.f32 %v877, %v932
        %934 = vmatmul.f32.gmra.mxu0 %v856
        %v935 = vpop.f32.mrf.mxu0
        %v936 = vadd.f32 %v877, %v935
        %937 = vmatmul.f32.gmra.mxu0 %v857
        %v938 = vpop.f32.mrf.mxu0
        %v939 = vadd.f32 %v877, %v938
        %940 = vmatmul.f32.gmra.mxu0 %v858
        %v941 = vpop.f32.mrf.mxu0
        %v942 = vadd.f32 %v877, %v941
        %943 = vdwg.mxu0
        %v944 = vtanh.pop %v897
        %v945 = vtanh.pop %v900
        %v946 = vtanh.pop %v903
        %v947 = vtanh.pop %v906
        %v948 = vtanh.pop %v909
        %v949 = vtanh.pop %v912
        %v950 = vtanh.pop %v915
        %v951 = vtanh.pop %v918
        %v952 = vtanh.pop %v921
        %v953 = vtanh.pop %v924
        %v954 = vtanh.pop %v927
        %v955 = vtanh.pop %v930
        %v956 = vtanh.pop %v933
        %v957 = vtanh.pop %v936
        %v958 = vtanh.pop %v939
        %v959 = vtanh.pop %v942
        %v960 = vld [vmem:[%s526] sm:$0xff]
        %v961 = vld [vmem:[%s526 + $0x8] sm:$0xff]
        %v962 = vld [vmem:[%s526 + $0x10] sm:$0xff]
        %v963 = vld [vmem:[%s526 + $0x18] sm:$0xff]
        %v964 = vld [vmem:[%s526 + $0x20] sm:$0xff]
        %v965 = vld [vmem:[%s526 + $0x28] sm:$0xff]
        %v966 = vld [vmem:[%s526 + $0x30] sm:$0xff]
        %v967 = vld [vmem:[%s526 + $0x38] sm:$0xff]
        %v968 = vld [vmem:[%s526 + $0x40] sm:$0xff]
        %v969 = vld [vmem:[%s526 + $0x48] sm:$0xff]
        %v970 = vld [vmem:[%s526 + $0x50] sm:$0xff]
        %v971 = vld [vmem:[%s526 + $0x58] sm:$0xff]
        %v972 = vld [vmem:[%s526 + $0x60] sm:$0xff]
        %v973 = vld [vmem:[%s526 + $0x68] sm:$0xff]
        %v974 = vld [vmem:[%s526 + $0x70] sm:$0xff]
        %v975 = vld [vmem:[%s526 + $0x78] sm:$0xff]
        %v976 = vmul.f32 %v944, %v960
        %v977 = vmul.f32 %v945, %v961
        %v978 = vmul.f32 %v946, %v962
        %v979 = vmul.f32 %v947, %v963
        %v980 = vmul.f32 %v948, %v964
        %v981 = vmul.f32 %v949, %v965
        %v982 = vmul.f32 %v950, %v966
        %v983 = vmul.f32 %v951, %v967
        %v984 = vmul.f32 %v952, %v968
        %v985 = vmul.f32 %v953, %v969
        %v986 = vmul.f32 %v954, %v970
        %v987 = vmul.f32 %v955, %v971
        %v988 = vmul.f32 %v956, %v972
        %v989 = vmul.f32 %v957, %v973
        %v990 = vmul.f32 %v958, %v974
        %v991 = vmul.f32 %v959, %v975
        %v992 = vld [vmem:[%s7] sm:$0x1]
        %v994 = vperm.slane %v992, 0
        %v996 = vmul.f32 %v976, %v994
        %v997 = vmul.f32 %v977, %v994
        %v998 = vmul.f32 %v978, %v994
        %v999 = vmul.f32 %v979, %v994
        %v1000 = vmul.f32 %v980, %v994
        %v1001 = vmul.f32 %v981, %v994
        %v1002 = vmul.f32 %v982, %v994
        %v1003 = vmul.f32 %v983, %v994
        %v1004 = vmul.f32 %v984, %v994
        %v1005 = vmul.f32 %v985, %v994
        %v1006 = vmul.f32 %v986, %v994
        %v1007 = vmul.f32 %v987, %v994
        %v1008 = vmul.f32 %v988, %v994
        %v1009 = vmul.f32 %v989, %v994
        %v1010 = vmul.f32 %v990, %v994
        %v1011 = vmul.f32 %v991, %v994
        %1012 = vadd.xlane.f32.xlu0 %v996
        %v1013 = vpop.xlane.xlu0 %1012
        %1014 = vadd.xlane.f32.xlu0 %v997
        %v1015 = vpop.xlane.xlu0 %1014
        %1016 = vadd.xlane.f32.xlu0 %v998
        %v1017 = vpop.xlane.xlu0 %1016
        %1018 = vadd.xlane.f32.xlu0 %v999
        %v1019 = vpop.xlane.xlu0 %1018
        %1020 = vadd.xlane.f32.xlu0 %v1000
        %v1021 = vpop.xlane.xlu0 %1020
        %1022 = vadd.xlane.f32.xlu0 %v1001
        %v1023 = vpop.xlane.xlu0 %1022
        %1024 = vadd.xlane.f32.xlu0 %v1002
        %v1025 = vpop.xlane.xlu0 %1024
        %1026 = vadd.xlane.f32.xlu0 %v1003
        %v1027 = vpop.xlane.xlu0 %1026
        %1028 = vadd.xlane.f32.xlu0 %v1004
        %v1029 = vpop.xlane.xlu0 %1028
        %1030 = vadd.xlane.f32.xlu0 %v1005
        %v1031 = vpop.xlane.xlu0 %1030
        %1032 = vadd.xlane.f32.xlu0 %v1006
        %v1033 = vpop.xlane.xlu0 %1032
        %1034 = vadd.xlane.f32.xlu0 %v1007
        %v1035 = vpop.xlane.xlu0 %1034
        %1036 = vadd.xlane.f32.xlu0 %v1008
        %v1037 = vpop.xlane.xlu0 %1036
        %1038 = vadd.xlane.f32.xlu0 %v1009
        %v1039 = vpop.xlane.xlu0 %1038
        %1040 = vadd.xlane.f32.xlu0 %v1010
        %v1041 = vpop.xlane.xlu0 %1040
        %1042 = vadd.xlane.f32.xlu0 %v1011
        %v1043 = vpop.xlane.xlu0 %1042
        %v1044 = vld [vmem:[#allocation2] sm:$0x1]
        %s1045 = vtos %v1044
        %v1046 = vstv %s1045
        %v1047 = vadd.f32 %v1013, %v1046
        %v1048 = vadd.f32 %v1015, %v1046
        %v1049 = vadd.f32 %v1017, %v1046
        %v1050 = vadd.f32 %v1019, %v1046
        %v1051 = vadd.f32 %v1021, %v1046
        %v1052 = vadd.f32 %v1023, %v1046
        %v1053 = vadd.f32 %v1025, %v1046
        %v1054 = vadd.f32 %v1027, %v1046
        %v1055 = vadd.f32 %v1029, %v1046
        %v1056 = vadd.f32 %v1031, %v1046
        %v1057 = vadd.f32 %v1033, %v1046
        %v1058 = vadd.f32 %v1035, %v1046
        %v1059 = vadd.f32 %v1037, %v1046
        %v1060 = vadd.f32 %v1039, %v1046
        %v1061 = vadd.f32 %v1041, %v1046
        %v1062 = vadd.f32 %v1043, %v1046
        %v1079 = vlaneseq
        %v1080 = vand.u32 %v1079, 127
        %v1081 = vperm.slane %v1047, %v1080
        %v1082 = vadd.s32 %v1080, 4294967288
        %v1083 = vperm.slane %v1048, %v1082
        %vm1084 = vcmask 130112
        %v1085 = vsel %vm1084, %v1083, %v1081
        %v1086 = vadd.s32 %v1080, 4294967280
        %v1087 = vperm.slane %v1049, %v1086
        %vm1088 = vcmask 195712
        %v1089 = vsel %vm1088, %v1087, %v1085
        %v1090 = vadd.s32 %v1080, 4294967272
        %v1091 = vperm.slane %v1050, %v1090
        %vm1092 = vcmask 261312
        %v1093 = vsel %vm1092, %v1091, %v1089
        %v1094 = vadd.s32 %v1080, 4294967264
        %v1095 = vperm.slane %v1051, %v1094
        %vm1096 = vcmask 326912
        %v1097 = vsel %vm1096, %v1095, %v1093
        %v1098 = vadd.s32 %v1080, 4294967256
        %v1099 = vperm.slane %v1052, %v1098
        %vm1100 = vcmask 392512
        %v1101 = vsel %vm1100, %v1099, %v1097
        %v1102 = vadd.s32 %v1080, 4294967248
        %v1103 = vperm.slane %v1053, %v1102
        %vm1104 = vcmask 458112
        %v1105 = vsel %vm1104, %v1103, %v1101
        %v1106 = vadd.s32 %v1080, 4294967240
        %v1107 = vperm.slane %v1054, %v1106
        %vm1108 = vcmask 523712
        %v1109 = vsel %vm1108, %v1107, %v1105
        %v1110 = vadd.s32 %v1080, 4294967232
        %v1111 = vperm.slane %v1055, %v1110
        %vm1112 = vcmask 589312
        %v1113 = vsel %vm1112, %v1111, %v1109
        %v1114 = vadd.s32 %v1080, 4294967224
        %v1115 = vperm.slane %v1056, %v1114
        %vm1116 = vcmask 654912
        %v1117 = vsel %vm1116, %v1115, %v1113
        %v1118 = vadd.s32 %v1080, 4294967216
        %v1119 = vperm.slane %v1057, %v1118
        %vm1120 = vcmask 720512
        %v1121 = vsel %vm1120, %v1119, %v1117
        %v1122 = vadd.s32 %v1080, 4294967208
        %v1123 = vperm.slane %v1058, %v1122
        %vm1124 = vcmask 786112
        %v1125 = vsel %vm1124, %v1123, %v1121
        %v1126 = vadd.s32 %v1080, 4294967200
        %v1127 = vperm.slane %v1059, %v1126
        %vm1128 = vcmask 851712
        %v1129 = vsel %vm1128, %v1127, %v1125
        %v1130 = vadd.s32 %v1080, 4294967192
        %v1131 = vperm.slane %v1060, %v1130
        %vm1132 = vcmask 917312
        %v1133 = vsel %vm1132, %v1131, %v1129
        %v1134 = vadd.s32 %v1080, 4294967184
        %v1135 = vperm.slane %v1061, %v1134
        %vm1136 = vcmask 982912
        %v1137 = vsel %vm1136, %v1135, %v1133
        %v1138 = vadd.s32 %v1080, 4294967176
        %v1139 = vperm.slane %v1062, %v1138
        %vm1140 = vcmask 1048512
        %v1141 = vsel %vm1140, %v1139, %v1137
        %1143 = vst [vmem:[%s576] sm:$0x1] %v1141
        %s1144 = sand.u32 %s306, 1
        %s1145 = scalar_lea.sflag [#allocation5], %s1144
        %s1146 = sand.u32 %s306, 1
        %s1147 = scalar_lea.vmem [#allocation14], %s1146
        // Predicated region
        $region97: #{tpu_custom_call.1} parent=67 // pred_check
          %p1148 = pneg %p316
        $region98: #{tpu_custom_call.1} parent=67 // pred_check_branch
          %1150 = sbr.rel (%p1148) target = $region100
        $region99: #{tpu_custom_call.1} parent=67 // pred_region
          %1152 = vsyncadd %s1145, 0
          %s1153 = scalar_lea.hbm %s12, %s31
          %s1155 = sshll.u32 %s1147, 4
          %s1156 = int_to_ptr.vmem [resolvable:$true] %s1155
          %s1157 = sshll.u32 %s1153, 4
          %s1158 = int_to_ptr.hbm [resolvable:$true] %s1157
          %1160 = dma.vmem_to_hbm [thread:$0]  %s1156, 16, %s1158, %s1145
        $region100: #{tpu_custom_call.1} parent=67 // pred_fallthru
          _
      $region68: #{tpu_custom_call.1} parent=5 // pred_fallthru
        _
      %p1161 = scmp.le.s32.totalorder 2, %s26
      // Predicated region
      $region101: #{tpu_custom_call.1} parent=5 // pred_check
        %p1162 = pneg %p1161
      $region102: #{tpu_custom_call.1} parent=5 // pred_check_branch
        %1164 = sbr.rel (%p1162) target = $region104
      $region103: #{tpu_custom_call.1} parent=5 // pred_region
        %s1165 = ssub.s32 %s26, 2
        // Predicated region
        $region105: #{tpu_custom_call.1} parent=103 // pred_check
          %p1166 = pneg %p322
        $region106: #{tpu_custom_call.1} parent=103 // pred_check_branch
          %1168 = sbr.rel (%p1166) target = $region108
        $region107: #{tpu_custom_call.1} parent=103 // pred_region
          %s1169 = sand.u32 %s307, 1
          %s1170 = scalar_lea.sflag [#allocation5], %s1169
          %s1171 = sand.u32 %s307, 1
          %s1172 = scalar_lea.vmem [#allocation14], %s1171
          %1174 = dma.done %s1170, 16
        $region108: #{tpu_custom_call.1} parent=103 // pred_fallthru
          _
      $region104: #{tpu_custom_call.1} parent=5 // pred_fallthru
        _
    $region6: #{tpu_custom_call.1} parent=1 // loop_footer
      %s30 = sadd.s32 1, %s26
    $region7: #{tpu_custom_call.1} parent=1 // loop_footer_branch
      %25 = sbr.rel target = $region3
    $region8: #{tpu_custom_call.1} parent=1 // loop_exit
      _
    %1175 = vsyncpa [#allocation4], 1
    %s1176 = scalar_lea.sflag [#allocation4], 1
    %1177 = vsyncpa %s1176, 1
    %1178 = vsyncpa [#allocation7], 1
    %1179 = vsyncpa [#allocation10], 1
    %1180 = vsyncpa [#allocation5], 1
    %s1181 = scalar_lea.sflag [#allocation5], 1
    %1182 = vsyncpa %s1181, 1

</llo_original>
